<compile_context>
chip_gen: v6e
topology: v6e:2x2x1
jax: 0.10.0
libtpu: 0.0.40
codegen_flags: <defaults>
</compile_context>

<pallas_src>
import functools

import jax
import jax.numpy as jnp
from jax.experimental import pallas as pl
from jax.experimental.pallas import tpu as pltpu

LANE = 128      # vreg lane width
SUBLANE = 8     # vreg sublane count (f32)
TILE_B_MAX = 1024   # batch-tile cap; fits easily in VMEM even on v7x (64 MiB)


def _round_up(n, m):
    return ((n + m - 1) // m) * m


def poker_mlp_kernel(x_ref, w1_ref, b1_ref, w2_ref, b2_ref, out_ref):
    # Padded, lane-dense shapes:
    #   x:  (TB, Dp)  bf16      w1: (Dp, Hp) bf16   b1: (1, Hp) f32
    #   w2: (Hp, Op)  bf16      b2: (1, Op)  f32    out:(TB, Op) f32
    # fc1: bf16 MXU matmul, f32 accumulate; bias + ReLU in f32 on the VPU.
    h = jnp.dot(x_ref[...], w1_ref[...], preferred_element_type=jnp.float32)
    h = jnp.maximum(h + b1_ref[...], 0.0)
    # fc2: cast activations to bf16 for the MXU, accumulate in f32.
    y = jnp.dot(h.astype(jnp.bfloat16), w2_ref[...],
                preferred_element_type=jnp.float32) + b2_ref[...]
    out_ref[...] = y.astype(out_ref.dtype)


def poker_model_forward(x, w1, b1, w2, b2):
    """x: (B, D_in) f32, w1: (D_in, H), b1: (1, H) or (H,), w2: (H, D_out),
    b2: (1, D_out) or (D_out,) -> (B, D_out) f32.

    Pads features to 128-lane multiples, tiles the batch over one parallel
    grid axis, and runs the whole MLP as a single fused Pallas kernel.
    Matmuls execute in bf16 on the MXU with f32 accumulation."""
    B, D_in = x.shape
    H = w1.shape[1]
    D_out = w2.shape[1]

    # Lane-dense padded feature dims.
    Dp = _round_up(D_in, LANE)
    Hp = _round_up(H, LANE)
    Op = _round_up(D_out, LANE)

    # Batch tiling: one grid axis, marked "parallel" (v7x: 2 TCs split it).
    tile_b = min(TILE_B_MAX, _round_up(B, SUBLANE))
    Bp = _round_up(B, tile_b)

    b1 = b1.reshape(1, -1)
    b2 = b2.reshape(1, -1)

    # Zero padding keeps the math exact: padded hidden cols get bias 0 ->
    # ReLU(0)=0, and padded w2 rows/cols are zero, so they contribute nothing.
    xp = jnp.pad(x, ((0, Bp - B), (0, Dp - D_in))).astype(jnp.bfloat16)
    w1p = jnp.pad(w1, ((0, Dp - D_in), (0, Hp - H))).astype(jnp.bfloat16)
    w2p = jnp.pad(w2, ((0, Hp - H), (0, Op - D_out))).astype(jnp.bfloat16)
    b1p = jnp.pad(b1, ((0, 0), (0, Hp - H))).astype(jnp.float32)
    b2p = jnp.pad(b2, ((0, 0), (0, Op - D_out))).astype(jnp.float32)

    out_padded = pl.pallas_call(
        poker_mlp_kernel,
        out_shape=jax.ShapeDtypeStruct((Bp, Op), jnp.float32),
        grid_spec=pltpu.PrefetchScalarGridSpec(
            num_scalar_prefetch=0,
            grid=(Bp // tile_b,),
            in_specs=[
                # batch-tiled activations
                pl.BlockSpec((tile_b, Dp), lambda i: (i, 0)),
                # weights / biases: constant index_map -> VMEM-resident across
                # all grid steps (no re-DMA per batch tile)
                pl.BlockSpec((Dp, Hp), lambda i: (0, 0)),
                pl.BlockSpec((1, Hp), lambda i: (0, 0)),
                pl.BlockSpec((Hp, Op), lambda i: (0, 0)),
                pl.BlockSpec((1, Op), lambda i: (0, 0)),
            ],
            out_specs=pl.BlockSpec((tile_b, Op), lambda i: (i, 0)),
        ),
        compiler_params=pltpu.CompilerParams(
            dimension_semantics=("parallel",),
        ),
    )(xp, w1p, b1p, w2p, b2p)

    return out_padded[:B, :D_out]


def init_params(key, input_dim, hidden_dim, output_dim):
    """Deterministic init mirroring nn.Linear's uniform(-1/sqrt(fan_in), +)."""
    k1, k2, k3, k4 = jax.random.split(key, 4)
    lim1 = 1.0 / jnp.sqrt(jnp.float32(input_dim))
    lim2 = 1.0 / jnp.sqrt(jnp.float32(hidden_dim))
    w1 = jax.random.uniform(k1, (input_dim, hidden_dim), jnp.float32, -lim1, lim1)
    b1 = jax.random.uniform(k2, (1, hidden_dim), jnp.float32, -lim1, lim1)
    w2 = jax.random.uniform(k3, (hidden_dim, output_dim), jnp.float32, -lim2, lim2)
    b2 = jax.random.uniform(k4, (1, output_dim), jnp.float32, -lim2, lim2)
    return w1, b1, w2, b2


if __name__ == "__main__":
    # Small shapes consistent with the module's forward: x is (batch, input_dim).
    batch, input_dim, hidden_dim, output_dim = 8, 32, 64, 16

    key = jax.random.PRNGKey(0)
    kx, kp = jax.random.split(key)
    x = jax.random.normal(kx, (batch, input_dim), jnp.float32)
    w1, b1, w2, b2 = init_params(kp, input_dim, hidden_dim, output_dim)

    fwd = jax.jit(poker_model_forward)
    out = jax.block_until_ready(fwd(x, w1, b1, w2, b2))
    assert out.shape == (batch, output_dim)

    # Reference 1: bf16-matmul / f32-accumulate reference (same numerics as
    # the kernel's MXU path) -> tight tolerance.
    bf = jnp.bfloat16
    h_ref = jnp.dot(x.astype(bf), w1.astype(bf),
                    preferred_element_type=jnp.float32) + b1
    h_ref = jnp.maximum(h_ref, 0.0)
    ref_bf16 = jnp.dot(h_ref.astype(bf), w2.astype(bf),
                       preferred_element_type=jnp.float32) + b2
    assert jnp.allclose(out, ref_bf16, atol=2e-3, rtol=2e-3)

    # Reference 2: pure f32 (exact PyTorch semantics) -> loose tolerance that
    # only reflects the deliberate bf16-matmul precision choice.
    ref_f32 = jnp.maximum(x @ w1 + b1, 0.0) @ w2 + b2
    assert jnp.allclose(out, ref_f32, atol=5e-2, rtol=5e-2)

    print("KERNEL_OK")
</pallas_src>

<mosaic_0001>
module attributes {stable_mosaic.version = 11 : i64} {
  func.func @poker_mlp_kernel(%arg0: i32, %arg1: memref<8x128xbf16, #tpu.memory_space<vmem>>, %arg2: memref<128x128xbf16, #tpu.memory_space<vmem>>, %arg3: memref<1x128xf32, #tpu.memory_space<vmem>>, %arg4: memref<128x128xbf16, #tpu.memory_space<vmem>>, %arg5: memref<1x128xf32, #tpu.memory_space<vmem>>, %arg6: memref<8x128xf32, #tpu.memory_space<vmem>>) attributes {dimension_semantics = [#tpu.dimension_semantics<parallel>], iteration_bounds = array<i64: 1>, scalar_prefetch = 0 : i64, scratch_operands = 0 : i64, tpu.core_type = #tpu.core_type<tc>, window_params = [{transform_indices = @transform_0, window_bounds = array<i64: 8, 128>}, {pipeline_mode = #tpu.pipeline_mode<synchronous>, transform_indices = @transform_1, window_bounds = array<i64: 128, 128>}, {pipeline_mode = #tpu.pipeline_mode<synchronous>, transform_indices = @transform_2, window_bounds = array<i64: 1, 128>}, {pipeline_mode = #tpu.pipeline_mode<synchronous>, transform_indices = @transform_3, window_bounds = array<i64: 128, 128>}, {pipeline_mode = #tpu.pipeline_mode<synchronous>, transform_indices = @transform_4, window_bounds = array<i64: 1, 128>}, {transform_indices = @transform_5, window_bounds = array<i64: 8, 128>}]} {
    %c0 = arith.constant 0 : index
    %c0_0 = arith.constant 0 : index
    %0 = vector.load %arg1[%c0, %c0_0] : memref<8x128xbf16, #tpu.memory_space<vmem>>, vector<8x128xbf16>
    %c0_1 = arith.constant 0 : index
    %c0_2 = arith.constant 0 : index
    %1 = vector.load %arg2[%c0_1, %c0_2] : memref<128x128xbf16, #tpu.memory_space<vmem>>, vector<128x128xbf16>
    %cst = arith.constant dense<0.000000e+00> : vector<8x128xf32>
    %2 = tpu.matmul %0, %1, %cst {dimension_numbers = #tpu.dot_dimension_numbers<[1], [0], [0], [1], [0, 0, 1, 1], [], []>} : vector<8x128xbf16>, vector<128x128xbf16>, vector<8x128xf32> -> vector<8x128xf32>
    %c0_3 = arith.constant 0 : index
    %c0_4 = arith.constant 0 : index
    %3 = vector.load %arg3[%c0_3, %c0_4] : memref<1x128xf32, #tpu.memory_space<vmem>>, vector<1x128xf32>
    %4 = vector.broadcast %3 : vector<1x128xf32> to vector<8x128xf32>
    %5 = arith.addf %2, %4 : vector<8x128xf32>
    %cst_5 = arith.constant 0.000000e+00 : f32
    %6 = vector.broadcast %cst_5 : f32 to vector<8x128xf32>
    %7 = arith.maximumf %5, %6 : vector<8x128xf32>
    %8 = arith.truncf %7 : vector<8x128xf32> to vector<8x128xbf16>
    %c0_6 = arith.constant 0 : index
    %c0_7 = arith.constant 0 : index
    %9 = vector.load %arg4[%c0_6, %c0_7] : memref<128x128xbf16, #tpu.memory_space<vmem>>, vector<128x128xbf16>
    %cst_8 = arith.constant dense<0.000000e+00> : vector<8x128xf32>
    %10 = tpu.matmul %8, %9, %cst_8 {dimension_numbers = #tpu.dot_dimension_numbers<[1], [0], [0], [1], [0, 0, 1, 1], [], []>} : vector<8x128xbf16>, vector<128x128xbf16>, vector<8x128xf32> -> vector<8x128xf32>
    %c0_9 = arith.constant 0 : index
    %c0_10 = arith.constant 0 : index
    %11 = vector.load %arg5[%c0_9, %c0_10] : memref<1x128xf32, #tpu.memory_space<vmem>>, vector<1x128xf32>
    %12 = vector.broadcast %11 : vector<1x128xf32> to vector<8x128xf32>
    %13 = arith.addf %10, %12 : vector<8x128xf32>
    %c0_11 = arith.constant 0 : index
    %c0_12 = arith.constant 0 : index
    %14 = vector.load %arg6[%c0_11, %c0_12] : memref<8x128xf32, #tpu.memory_space<vmem>>, vector<8x128xf32>
    tpu.vector_store %arg6[%c0_11, %c0_12], %13 {strides = array<i32>} : memref<8x128xf32, #tpu.memory_space<vmem>>, vector<8x128xf32>,
    return
  }
  func.func @transform_0(%arg0: i32) -> (i32, i32) {
    %c0_i32 = arith.constant 0 : i32
    %c0_i32_0 = arith.constant 0 : i32
    return %arg0, %c0_i32 : i32, i32
  }
  func.func @transform_1(%arg0: i32) -> (i32, i32) {
    %c0_i32 = arith.constant 0 : i32
    %c0_i32_0 = arith.constant 0 : i32
    %c0_i32_1 = arith.constant 0 : i32
    return %c0_i32, %c0_i32_0 : i32, i32
  }
  func.func @transform_2(%arg0: i32) -> (i32, i32) {
    %c0_i32 = arith.constant 0 : i32
    %c0_i32_0 = arith.constant 0 : i32
    %c0_i32_1 = arith.constant 0 : i32
    return %c0_i32, %c0_i32_0 : i32, i32
  }
  func.func @transform_3(%arg0: i32) -> (i32, i32) {
    %c0_i32 = arith.constant 0 : i32
    %c0_i32_0 = arith.constant 0 : i32
    %c0_i32_1 = arith.constant 0 : i32
    return %c0_i32, %c0_i32_0 : i32, i32
  }
  func.func @transform_4(%arg0: i32) -> (i32, i32) {
    %c0_i32 = arith.constant 0 : i32
    %c0_i32_0 = arith.constant 0 : i32
    %c0_i32_1 = arith.constant 0 : i32
    return %c0_i32, %c0_i32_0 : i32, i32
  }
  func.func @transform_5(%arg0: i32) -> (i32, i32) {
    %c0_i32 = arith.constant 0 : i32
    %c0_i32_0 = arith.constant 0 : i32
    return %arg0, %c0_i32 : i32, i32
  }
}

</mosaic_0001>

<llo_original>
// kernel: poker_model_forward.1
$region0: #{poker_model_forward.1}
  #allocation0 [shape = 'u32[]', space=smem, size = 0x4, offset = 0x4, fixed_abs, tag = 'smem constant byte address 0x4 - core index']
  #allocation1 [shape = 'u32[144,128]{1,0:T(1,128)}', space=vmem, size = 0x12000, scoped, tag = 'internal scratch']
  %s0 = inlined_call_operand.vmem [shape: bf16[8,128], index: 0, kind: input, shape index: {}]
  %s1 = inlined_call_operand.vmem [shape: bf16[128,128], index: 1, kind: input, shape index: {}]
  %s2 = inlined_call_operand.vmem [shape: f32[1,128], index: 2, kind: input, shape index: {}]
  %s3 = inlined_call_operand.vmem [shape: bf16[128,128], index: 3, kind: input, shape index: {}]
  %s4 = inlined_call_operand.vmem [shape: f32[1,128], index: 4, kind: input, shape index: {}]
  %s5 = inlined_call_operand.hbm [shape: f32[8,128], index: 5, kind: output, shape index: {}]
  %s6 = sld [smem:[#allocation0]]
  $region30: #{poker_model_forward.1} parent=0
    _
  %s8 = ssub.s32 1, %s6
  %s9 = scalar_select 0, %s8, %s6
  $region1: #{poker_model_forward.1} parent=0
    #allocation2 [shape = 'u8[4096]{0}', space=vmem, size = 0x1000, scoped, tag = 'output window, operand 0, single buffered']
    #allocation3 [shape = 's32[1]{0}', space=sflag, size = 0x4, scoped, tag = 'scoped memory for poker_model_forward.1']
    %10 = vsyncpa [#allocation3], 0
    // Predicated region
    $region2: #{poker_model_forward.1} parent=1 // pred_check
      _
    $region3: #{poker_model_forward.1} parent=1 // pred_check_branch
      %12 = sbr.rel (0) target = $region5
    $region4: #{poker_model_forward.1} parent=1 // pred_region
      _
    $region5: #{poker_model_forward.1} parent=1 // pred_fallthru
      _
    // Predicated region
    $region6: #{poker_model_forward.1} parent=1 // pred_check
      _
    $region7: #{poker_model_forward.1} parent=1 // pred_check_branch
      %14 = sbr.rel (0) target = $region9
    $region8: #{poker_model_forward.1} parent=1 // pred_region
      _
    $region9: #{poker_model_forward.1} parent=1 // pred_fallthru
      _
    // Predicated region
    $region10: #{poker_model_forward.1} parent=1 // pred_check
      _
    $region11: #{poker_model_forward.1} parent=1 // pred_check_branch
      %16 = sbr.rel (0) target = $region13
    $region12: #{poker_model_forward.1} parent=1 // pred_region
      _
    $region13: #{poker_model_forward.1} parent=1 // pred_fallthru
      _
    // Predicated region
    $region14: #{poker_model_forward.1} parent=1 // pred_check
      _
    $region15: #{poker_model_forward.1} parent=1 // pred_check_branch
      %18 = sbr.rel (0) target = $region17
    $region16: #{poker_model_forward.1} parent=1 // pred_region
      _
    $region17: #{poker_model_forward.1} parent=1 // pred_fallthru
      _
    // Predicated region
    $region18: #{poker_model_forward.1} parent=1 // pred_check
      _
    $region19: #{poker_model_forward.1} parent=1 // pred_check_branch
      %20 = sbr.rel (0) target = $region21
    $region20: #{poker_model_forward.1} parent=1 // pred_region
      _
    $region21: #{poker_model_forward.1} parent=1 // pred_fallthru
      _
    %v22 = vld [vmem:[%s0] sm:$0xf]
    %v23 = vld [vmem:[%s1] sm:$0xf]
    %v24 = vld [vmem:[%s1 + $0x4] sm:$0xf]
    %v25 = vld [vmem:[%s1 + $0x8] sm:$0xf]
    %v26 = vld [vmem:[%s1 + $0xc] sm:$0xf]
    %v27 = vld [vmem:[%s1 + $0x10] sm:$0xf]
    %v28 = vld [vmem:[%s1 + $0x14] sm:$0xf]
    %v29 = vld [vmem:[%s1 + $0x18] sm:$0xf]
    %v30 = vld [vmem:[%s1 + $0x1c] sm:$0xf]
    %v31 = vld [vmem:[%s1 + $0x20] sm:$0xf]
    %v32 = vld [vmem:[%s1 + $0x24] sm:$0xf]
    %v33 = vld [vmem:[%s1 + $0x28] sm:$0xf]
    %v34 = vld [vmem:[%s1 + $0x2c] sm:$0xf]
    %v35 = vld [vmem:[%s1 + $0x30] sm:$0xf]
    %v36 = vld [vmem:[%s1 + $0x34] sm:$0xf]
    %v37 = vld [vmem:[%s1 + $0x38] sm:$0xf]
    %v38 = vld [vmem:[%s1 + $0x3c] sm:$0xf]
    %v39 = vld [vmem:[%s2] sm:$0x1]
    %v41 = vlaneseq
    %v42 = vshrl.u32 %v41, 7
    %v43 = vsub.s32 0, %v42
    %v44 = vrot.slane %v39, %v43
    %v62 = vunpack.c.l.b16 %v23
    %v63 = vunpack.c.l.b16 %v24
    %v64 = vunpack.c.l.b16 %v25
    %v65 = vunpack.c.l.b16 %v26
    %v66 = vunpack.c.l.b16 %v27
    %v67 = vunpack.c.l.b16 %v28
    %v68 = vunpack.c.l.b16 %v29
    %v69 = vunpack.c.l.b16 %v30
    %v70 = vunpack.c.l.b16 %v31
    %v71 = vunpack.c.l.b16 %v32
    %v72 = vunpack.c.l.b16 %v33
    %v73 = vunpack.c.l.b16 %v34
    %v74 = vunpack.c.l.b16 %v35
    %v75 = vunpack.c.l.b16 %v36
    %v76 = vunpack.c.l.b16 %v37
    %v77 = vunpack.c.l.b16 %v38
    %v78 = vpack.c.b16 %v63, %v62
    %v79 = vpack.c.b16 %v65, %v64
    %v80 = vpack.c.b16 %v67, %v66
    %v81 = vpack.c.b16 %v69, %v68
    %v82 = vpack.c.b16 %v71, %v70
    %v83 = vpack.c.b16 %v73, %v72
    %v84 = vpack.c.b16 %v75, %v74
    %v85 = vpack.c.b16 %v77, %v76
    %94 = vmatprep.subr.bf16.mxu0 0
    %95 = vmatpush1.bf16.msra.mxu0 %v85
    %96 = vmatprep.subr.bf16.mxu0 0
    %97 = vmatpush1.bf16.msra.mxu0 %v84
    %98 = vmatprep.subr.bf16.mxu0 0
    %99 = vmatpush1.bf16.msra.mxu0 %v83
    %100 = vmatprep.subr.bf16.mxu0 0
    %101 = vmatpush1.bf16.msra.mxu0 %v82
    %102 = vmatprep.subr.bf16.mxu0 0
    %103 = vmatpush1.bf16.msra.mxu0 %v81
    %104 = vmatprep.subr.bf16.mxu0 0
    %105 = vmatpush1.bf16.msra.mxu0 %v80
    %106 = vmatprep.subr.bf16.mxu0 0
    %107 = vmatpush1.bf16.msra.mxu0 %v79
    %108 = vmatprep.subr.bf16.mxu0 0
    %109 = vmatpush1.bf16.msra.mxu0 %v78
    %110 = vmatprep.subr.bf16.mxu0 0
    %111 = vmatpush2.bf16.msra.mxu0 0
    %112 = vmatprep.subr.bf16.mxu0 0
    %113 = vmatpush2.bf16.msra.mxu0 0
    %114 = vmatprep.subr.bf16.mxu0 0
    %115 = vmatpush2.bf16.msra.mxu0 0
    %116 = vmatprep.subr.bf16.mxu0 0
    %117 = vmatpush2.bf16.msra.mxu0 0
    %118 = vmatprep.subr.bf16.mxu0 0
    %119 = vmatpush2.bf16.msra.mxu0 0
    %120 = vmatprep.subr.bf16.mxu0 0
    %121 = vmatpush2.bf16.msra.mxu0 0
    %122 = vmatprep.subr.bf16.mxu0 0
    %123 = vmatpush2.bf16.msra.mxu0 0
    %124 = vmatprep.subr.bf16.mxu0 0
    %125 = vmatpush2.bf16.msra.mxu0 0
    %126 = vmatprep.mubr.bf16.mxu0 0
    %127 = vmatmul.mubr.bf16.gmra.mxu0 %v22
    %v128 = vpop.f32.mrf.mxu0
    %v129 = vadd.f32 %v44, %v128
    %v130 = vpop.f32.mrf.mxu0
    %v131 = vpop.f32.mrf.mxu0
    %v132 = vpop.f32.mrf.mxu0
    %133 = vdwg.mxu0
    %v134 = vmax.f32 %v129, 0.0
    %v135 = vpack.c.bf16 %v134, %v134
    %v136 = vld [vmem:[%s3] sm:$0xf]
    %v137 = vld [vmem:[%s3 + $0x4] sm:$0xf]
    %v138 = vld [vmem:[%s3 + $0x8] sm:$0xf]
    %v139 = vld [vmem:[%s3 + $0xc] sm:$0xf]
    %v140 = vld [vmem:[%s3 + $0x10] sm:$0xf]
    %v141 = vld [vmem:[%s3 + $0x14] sm:$0xf]
    %v142 = vld [vmem:[%s3 + $0x18] sm:$0xf]
    %v143 = vld [vmem:[%s3 + $0x1c] sm:$0xf]
    %v144 = vld [vmem:[%s3 + $0x20] sm:$0xf]
    %v145 = vld [vmem:[%s3 + $0x24] sm:$0xf]
    %v146 = vld [vmem:[%s3 + $0x28] sm:$0xf]
    %v147 = vld [vmem:[%s3 + $0x2c] sm:$0xf]
    %v148 = vld [vmem:[%s3 + $0x30] sm:$0xf]
    %v149 = vld [vmem:[%s3 + $0x34] sm:$0xf]
    %v150 = vld [vmem:[%s3 + $0x38] sm:$0xf]
    %v151 = vld [vmem:[%s3 + $0x3c] sm:$0xf]
    %v152 = vld [vmem:[%s4] sm:$0x1]
    %v154 = vlaneseq
    %v155 = vshrl.u32 %v154, 7
    %v156 = vsub.s32 0, %v155
    %v157 = vrot.slane %v152, %v156
    %v175 = vunpack.c.l.b16 %v136
    %v176 = vunpack.c.l.b16 %v137
    %v177 = vunpack.c.l.b16 %v138
    %v178 = vunpack.c.l.b16 %v139
    %v179 = vunpack.c.l.b16 %v140
    %v180 = vunpack.c.l.b16 %v141
    %v181 = vunpack.c.l.b16 %v142
    %v182 = vunpack.c.l.b16 %v143
    %v183 = vunpack.c.l.b16 %v144
    %v184 = vunpack.c.l.b16 %v145
    %v185 = vunpack.c.l.b16 %v146
    %v186 = vunpack.c.l.b16 %v147
    %v187 = vunpack.c.l.b16 %v148
    %v188 = vunpack.c.l.b16 %v149
    %v189 = vunpack.c.l.b16 %v150
    %v190 = vunpack.c.l.b16 %v151
    %v191 = vpack.c.b16 %v176, %v175
    %v192 = vpack.c.b16 %v178, %v177
    %v193 = vpack.c.b16 %v180, %v179
    %v194 = vpack.c.b16 %v182, %v181
    %v195 = vpack.c.b16 %v184, %v183
    %v196 = vpack.c.b16 %v186, %v185
    %v197 = vpack.c.b16 %v188, %v187
    %v198 = vpack.c.b16 %v190, %v189
    %207 = vmatprep.subr.bf16.mxu0 0
    %208 = vmatpush1.bf16.msra.mxu0 %v198
    %209 = vmatprep.subr.bf16.mxu0 0
    %210 = vmatpush1.bf16.msra.mxu0 %v197
    %211 = vmatprep.subr.bf16.mxu0 0
    %212 = vmatpush1.bf16.msra.mxu0 %v196
    %213 = vmatprep.subr.bf16.mxu0 0
    %214 = vmatpush1.bf16.msra.mxu0 %v195
    %215 = vmatprep.subr.bf16.mxu0 0
    %216 = vmatpush1.bf16.msra.mxu0 %v194
    %217 = vmatprep.subr.bf16.mxu0 0
    %218 = vmatpush1.bf16.msra.mxu0 %v193
    %219 = vmatprep.subr.bf16.mxu0 0
    %220 = vmatpush1.bf16.msra.mxu0 %v192
    %221 = vmatprep.subr.bf16.mxu0 0
    %222 = vmatpush1.bf16.msra.mxu0 %v191
    %223 = vmatprep.subr.bf16.mxu0 0
    %224 = vmatpush2.bf16.msra.mxu0 0
    %225 = vmatprep.subr.bf16.mxu0 0
    %226 = vmatpush2.bf16.msra.mxu0 0
    %227 = vmatprep.subr.bf16.mxu0 0
    %228 = vmatpush2.bf16.msra.mxu0 0
    %229 = vmatprep.subr.bf16.mxu0 0
    %230 = vmatpush2.bf16.msra.mxu0 0
    %231 = vmatprep.subr.bf16.mxu0 0
    %232 = vmatpush2.bf16.msra.mxu0 0
    %233 = vmatprep.subr.bf16.mxu0 0
    %234 = vmatpush2.bf16.msra.mxu0 0
    %235 = vmatprep.subr.bf16.mxu0 0
    %236 = vmatpush2.bf16.msra.mxu0 0
    %237 = vmatprep.subr.bf16.mxu0 0
    %238 = vmatpush2.bf16.msra.mxu0 0
    %239 = vmatprep.mubr.bf16.mxu0 0
    %240 = vmatmul.mubr.bf16.gmra.mxu0 %v135
    %v241 = vpop.f32.mrf.mxu0
    %v242 = vadd.f32 %v157, %v241
    %v243 = vpop.f32.mrf.mxu0
    %v244 = vpop.f32.mrf.mxu0
    %v245 = vpop.f32.mrf.mxu0
    %246 = vdwg.mxu0
    %247 = vst [vmem:[#allocation2] sm:$0xff] %v242
    // Predicated region
    $region22: #{poker_model_forward.1} parent=1 // pred_check
      _
    $region23: #{poker_model_forward.1} parent=1 // pred_check_branch
      %249 = sbr.rel (0) target = $region25
    $region24: #{poker_model_forward.1} parent=1 // pred_region
      %s251 = ssub.s32 128, 128
      %252 = vsyncadd [#allocation3], %s251
      %s254 = sshll.u32 [#allocation2], 4
      %s255 = int_to_ptr.vmem [resolvable:$true] %s254
      %257 = dma.vmem_to_hbm [thread:$0]  %s255, 128, %s5, [#allocation3]
    $region25: #{poker_model_forward.1} parent=1 // pred_fallthru
      _
    // Predicated region
    $region26: #{poker_model_forward.1} parent=1 // pred_check
      _
    $region27: #{poker_model_forward.1} parent=1 // pred_check_branch
      %259 = sbr.rel (0) target = $region29
    $region28: #{poker_model_forward.1} parent=1 // pred_region
      %260 = dma.done [#allocation3], 128
    $region29: #{poker_model_forward.1} parent=1 // pred_fallthru
      _
    %261 = vsyncpa [#allocation3], 1

</llo_original>
